<compile_context>
chip_gen: v5e
topology: v5e:2x2
jax: 0.10.0
libtpu: 0.0.40
codegen_flags: <defaults>
</compile_context>

<pallas_src>
import functools

import jax
import jax.numpy as jnp
from jax.experimental import pallas as pl
from jax.experimental.pallas import tpu as pltpu

LANE = 128
NEG_BIG = -1e30  # large-negative bias for padded output lanes (kills them in softmax)


def mlp_kernel(x_ref, w1_ref, b1_ref, w2_ref, b2_ref, o_ref):
    """One batch tile of log_softmax(tanh(x @ W1 + b1) @ W2 + b2, axis=-1).

    MXU operands are bf16; accumulation and all element-wise math (bias add,
    tanh, log-softmax) stay f32.
    """
    x = x_ref[...]                                            # (TB, D_in)  bf16
    # Hidden layer: bf16 MXU matmul, f32 accumulation, f32 tanh (EUP).
    h = jnp.dot(x, w1_ref[...], preferred_element_type=jnp.float32)
    h = jnp.tanh(h + b1_ref[...])                             # (TB, H) f32, implicit row-broadcast
    # Output layer onto the lane-dense (padded to 128) output slab.
    logits = jnp.dot(h.astype(w2_ref.dtype), w2_ref[...],
                     preferred_element_type=jnp.float32)
    logits = logits + b2_ref[...]                             # (TB, O_pad) f32; padded lanes == NEG_BIG
    # Numerically stable log-softmax over the lane axis (== torch dim=1 after squeeze).
    m = jnp.max(logits, axis=-1, keepdims=True)
    z = logits - m
    lse = jnp.log(jnp.sum(jnp.exp(z), axis=-1, keepdims=True))
    o_ref[...] = (z - lse).astype(o_ref.dtype)


def _pick_tile_b(batch, max_tile):
    """Largest divisor of `batch` that is <= max_tile (one big tile when small)."""
    tb = min(batch, max_tile)
    while batch % tb:
        tb -= 1
    return tb


@functools.partial(jax.jit, static_argnames=("max_tile_b",))
def simple_mlp_forward(data_input, w1, b1, w2, b2, max_tile_b=256):
    # Glue: replicate `data_input.squeeze(dim=1)`.
    x = jnp.squeeze(data_input, axis=1)                       # (B, D_in)
    B, D_in = x.shape
    H = w1.shape[1]
    O = w2.shape[1]

    # --- Lane-dense output path: pad output features to a multiple of 128. ---
    O_pad = max(LANE, ((O + LANE - 1) // LANE) * LANE)
    w2p = jnp.pad(w2, ((0, 0), (0, O_pad - O)))                       # zero cols
    b2p = jnp.pad(b2, ((0, 0), (0, O_pad - O)), constant_values=NEG_BIG)

    # --- bf16 MXU operands (biases stay f32; accumulation is f32 in-kernel). ---
    x_bf = x.astype(jnp.bfloat16)
    w1_bf = w1.astype(jnp.bfloat16)
    w2_bf = w2p.astype(jnp.bfloat16)

    # --- Collapsed grid: one (or few) large batch tiles. ---
    # NOTE: on v7x (2 TCs) a >=2-step grid would use both cores; at B=16 this is noise.
    tile_b = _pick_tile_b(B, max_tile_b)
    grid = (B // tile_b,)

    # Advisory cost hint so XLA does not over-serialize around the custom call.
    flops = 2 * B * (D_in * H + H * O_pad)
    transcendentals = B * (H + O_pad)         # tanh + exp/log
    bytes_accessed = (x_bf.size * 2 + w1_bf.size * 2 + w2_bf.size * 2
                      + b1.size * 4 + b2p.size * 4 + B * O_pad * 4)
    cost = pl.CostEstimate(flops=flops, transcendentals=transcendentals,
                           bytes_accessed=bytes_accessed)

    out = pl.pallas_call(
        mlp_kernel,
        out_shape=jax.ShapeDtypeStruct((B, O_pad), jnp.float32),
        grid_spec=pltpu.PrefetchScalarGridSpec(
            num_scalar_prefetch=0,
            grid=grid,
            in_specs=[
                pl.BlockSpec((tile_b, D_in), lambda i: (i, 0)),   # x tile
                pl.BlockSpec((D_in, H), lambda i: (0, 0)),        # W1 (resident)
                pl.BlockSpec((1, H), lambda i: (0, 0)),           # b1
                pl.BlockSpec((H, O_pad), lambda i: (0, 0)),       # W2 (resident, padded)
                pl.BlockSpec((1, O_pad), lambda i: (0, 0)),       # b2 (padded)
            ],
            out_specs=pl.BlockSpec((tile_b, O_pad), lambda i: (i, 0)),
        ),
        compiler_params=pltpu.CompilerParams(
            dimension_semantics=("parallel",)),
        cost_estimate=cost,
    )(x_bf, w1_bf, b1, w2_bf, b2p)

    # Slice off the lane padding (outside the kernel, cheap XLA slice).
    return out[:, :O]


def init_params(key, input_size, hidden_size, output_size):
    """Deterministic PyTorch-style Linear init: U(-1/sqrt(fan_in), 1/sqrt(fan_in))."""
    k1, k2, k3, k4 = jax.random.split(key, 4)
    lim1 = 1.0 / jnp.sqrt(jnp.float32(input_size))
    lim2 = 1.0 / jnp.sqrt(jnp.float32(hidden_size))
    # Stored already transposed: (in, out).
    w1 = jax.random.uniform(k1, (input_size, hidden_size), jnp.float32, -lim1, lim1)
    b1 = jax.random.uniform(k2, (1, hidden_size), jnp.float32, -lim1, lim1)
    w2 = jax.random.uniform(k3, (hidden_size, output_size), jnp.float32, -lim2, lim2)
    b2 = jax.random.uniform(k4, (1, output_size), jnp.float32, -lim2, lim2)
    return w1, b1, w2, b2


if __name__ == "__main__":
    # Hyperparams consistent with Simple_MLP (default nb_layers=1 path).
    # TODO(synk): nb_layers > 1 would chain extra (Linear, Tanh) blocks; only the
    # default nb_layers=1 topology is materialized here.
    B, input_size, hidden_size, output_size = 16, 16, 32, 10

    key = jax.random.PRNGKey(0)
    k_x, k_p = jax.random.split(key)
    # PyTorch forward squeezes dim=1 -> input is [B, 1, input_size].
    data_input = jax.random.normal(k_x, (B, 1, input_size), dtype=jnp.float32)
    w1, b1, w2, b2 = init_params(k_p, input_size, hidden_size, output_size)

    out = simple_mlp_forward(data_input, w1, b1, w2, b2)
    out = jax.block_until_ready(out)

    # Sanity: shape, rows exp-sum to 1, and agreement with a plain-jnp f32 reference
    # (tolerance accounts for bf16 MXU operands).
    x = jnp.squeeze(data_input, axis=1)
    ref = jax.nn.log_softmax(jnp.tanh(x @ w1 + b1) @ w2 + b2, axis=-1)
    assert out.shape == (B, output_size)
    assert jnp.allclose(jnp.sum(jnp.exp(out), axis=1), 1.0, atol=1e-5)
    assert jnp.max(jnp.abs(out - ref)) < 1e-1

    print("KERNEL_OK")
</pallas_src>

<mosaic_0001>
module attributes {stable_mosaic.version = 11 : i64} {
  func.func @mlp_kernel(%arg0: i32, %arg1: memref<16x16xbf16, #tpu.memory_space<vmem>>, %arg2: memref<16x32xbf16, #tpu.memory_space<vmem>>, %arg3: memref<1x32xf32, #tpu.memory_space<vmem>>, %arg4: memref<32x128xbf16, #tpu.memory_space<vmem>>, %arg5: memref<1x128xf32, #tpu.memory_space<vmem>>, %arg6: memref<16x128xf32, #tpu.memory_space<vmem>>) attributes {dimension_semantics = [#tpu.dimension_semantics<parallel>], iteration_bounds = array<i64: 1>, scalar_prefetch = 0 : i64, scratch_operands = 0 : i64, tpu.core_type = #tpu.core_type<tc>, window_params = [{transform_indices = @transform_0, window_bounds = array<i64: 16, 16>}, {pipeline_mode = #tpu.pipeline_mode<synchronous>, transform_indices = @transform_1, window_bounds = array<i64: 16, 32>}, {pipeline_mode = #tpu.pipeline_mode<synchronous>, transform_indices = @transform_2, window_bounds = array<i64: 1, 32>}, {pipeline_mode = #tpu.pipeline_mode<synchronous>, transform_indices = @transform_3, window_bounds = array<i64: 32, 128>}, {pipeline_mode = #tpu.pipeline_mode<synchronous>, transform_indices = @transform_4, window_bounds = array<i64: 1, 128>}, {transform_indices = @transform_5, window_bounds = array<i64: 16, 128>}]} {
    %c0 = arith.constant 0 : index
    %c0_0 = arith.constant 0 : index
    %0 = vector.load %arg1[%c0, %c0_0] : memref<16x16xbf16, #tpu.memory_space<vmem>>, vector<16x16xbf16>
    %c0_1 = arith.constant 0 : index
    %c0_2 = arith.constant 0 : index
    %1 = vector.load %arg2[%c0_1, %c0_2] : memref<16x32xbf16, #tpu.memory_space<vmem>>, vector<16x32xbf16>
    %cst = arith.constant dense<0.000000e+00> : vector<16x32xf32>
    %2 = tpu.matmul %0, %1, %cst {dimension_numbers = #tpu.dot_dimension_numbers<[1], [0], [0], [1], [0, 0, 1, 1], [], []>} : vector<16x16xbf16>, vector<16x32xbf16>, vector<16x32xf32> -> vector<16x32xf32>
    %c0_3 = arith.constant 0 : index
    %c0_4 = arith.constant 0 : index
    %3 = vector.load %arg3[%c0_3, %c0_4] : memref<1x32xf32, #tpu.memory_space<vmem>>, vector<1x32xf32>
    %4 = vector.broadcast %3 : vector<1x32xf32> to vector<16x32xf32>
    %5 = arith.addf %2, %4 : vector<16x32xf32>
    %6 = math.tanh %5 : vector<16x32xf32>
    %7 = arith.truncf %6 : vector<16x32xf32> to vector<16x32xbf16>
    %c0_5 = arith.constant 0 : index
    %c0_6 = arith.constant 0 : index
    %8 = vector.load %arg4[%c0_5, %c0_6] : memref<32x128xbf16, #tpu.memory_space<vmem>>, vector<32x128xbf16>
    %cst_7 = arith.constant dense<0.000000e+00> : vector<16x128xf32>
    %9 = tpu.matmul %7, %8, %cst_7 {dimension_numbers = #tpu.dot_dimension_numbers<[1], [0], [0], [1], [0, 0, 1, 1], [], []>} : vector<16x32xbf16>, vector<32x128xbf16>, vector<16x128xf32> -> vector<16x128xf32>
    %c0_8 = arith.constant 0 : index
    %c0_9 = arith.constant 0 : index
    %10 = vector.load %arg5[%c0_8, %c0_9] : memref<1x128xf32, #tpu.memory_space<vmem>>, vector<1x128xf32>
    %11 = vector.broadcast %10 : vector<1x128xf32> to vector<16x128xf32>
    %12 = arith.addf %9, %11 : vector<16x128xf32>
    %cst_10 = arith.constant dense<0xFF800000> : vector<16xf32>
    %13 = vector.multi_reduction <maximumf>, %12, %cst_10 [1] : vector<16x128xf32> to vector<16xf32>
    %14 = vector.shape_cast %13 : vector<16xf32> to vector<16x1xf32>
    %15 = vector.broadcast %14 : vector<16x1xf32> to vector<16x128xf32>
    %16 = arith.subf %12, %15 : vector<16x128xf32>
    %17 = math.exp %16 : vector<16x128xf32>
    %cst_11 = arith.constant dense<0.000000e+00> : vector<16xf32>
    %18 = vector.multi_reduction <add>, %17, %cst_11 [1] : vector<16x128xf32> to vector<16xf32>
    %19 = vector.shape_cast %18 : vector<16xf32> to vector<16x1xf32>
    %20 = math.log %19 : vector<16x1xf32>
    %21 = vector.broadcast %20 : vector<16x1xf32> to vector<16x128xf32>
    %22 = arith.subf %16, %21 : vector<16x128xf32>
    %c0_12 = arith.constant 0 : index
    %c0_13 = arith.constant 0 : index
    %23 = vector.load %arg6[%c0_12, %c0_13] : memref<16x128xf32, #tpu.memory_space<vmem>>, vector<16x128xf32>
    tpu.vector_store %arg6[%c0_12, %c0_13], %22 {strides = array<i32>} : memref<16x128xf32, #tpu.memory_space<vmem>>, vector<16x128xf32>,
    return
  }
  func.func @transform_0(%arg0: i32) -> (i32, i32) {
    %c0_i32 = arith.constant 0 : i32
    %c0_i32_0 = arith.constant 0 : i32
    return %arg0, %c0_i32 : i32, i32
  }
  func.func @transform_1(%arg0: i32) -> (i32, i32) {
    %c0_i32 = arith.constant 0 : i32
    %c0_i32_0 = arith.constant 0 : i32
    %c0_i32_1 = arith.constant 0 : i32
    return %c0_i32, %c0_i32_0 : i32, i32
  }
  func.func @transform_2(%arg0: i32) -> (i32, i32) {
    %c0_i32 = arith.constant 0 : i32
    %c0_i32_0 = arith.constant 0 : i32
    %c0_i32_1 = arith.constant 0 : i32
    return %c0_i32, %c0_i32_0 : i32, i32
  }
  func.func @transform_3(%arg0: i32) -> (i32, i32) {
    %c0_i32 = arith.constant 0 : i32
    %c0_i32_0 = arith.constant 0 : i32
    %c0_i32_1 = arith.constant 0 : i32
    return %c0_i32, %c0_i32_0 : i32, i32
  }
  func.func @transform_4(%arg0: i32) -> (i32, i32) {
    %c0_i32 = arith.constant 0 : i32
    %c0_i32_0 = arith.constant 0 : i32
    %c0_i32_1 = arith.constant 0 : i32
    return %c0_i32, %c0_i32_0 : i32, i32
  }
  func.func @transform_5(%arg0: i32) -> (i32, i32) {
    %c0_i32 = arith.constant 0 : i32
    %c0_i32_0 = arith.constant 0 : i32
    return %arg0, %c0_i32 : i32, i32
  }
}

</mosaic_0001>

<llo_original>
// kernel: simple_mlp_forward.1
$region0: #{simple_mlp_forward.1}
  #allocation0 [shape = 'u32[]', space=smem, size = 0x4, offset = 0x4, fixed_abs, tag = 'smem constant byte address 0x4 - core index']
  #allocation1 [shape = 'u32[72,128]{1,0:T(1,128)}', space=vmem, size = 0x9000, scoped, tag = 'internal scratch']
  %s0 = inlined_call_operand.vmem [shape: bf16[16,16], index: 0, kind: input, shape index: {}]
  %s1 = inlined_call_operand.vmem [shape: bf16[16,32], index: 1, kind: input, shape index: {}]
  %s2 = inlined_call_operand.vmem [shape: f32[1,32], index: 2, kind: input, shape index: {}]
  %s3 = inlined_call_operand.vmem [shape: bf16[32,128], index: 3, kind: input, shape index: {}]
  %s4 = inlined_call_operand.vmem [shape: f32[1,128], index: 4, kind: input, shape index: {}]
  %s5 = inlined_call_operand.hbm [shape: f32[16,128], index: 5, kind: output, shape index: {}]
  %s6 = sld [smem:[#allocation0]]
  $region30: #{simple_mlp_forward.1} parent=0
    _
  %s8 = ssub.s32 1, %s6
  %s9 = scalar_select 0, %s8, %s6
  $region1: #{simple_mlp_forward.1} parent=0
    #allocation2 [shape = 'u8[8192]{0}', space=vmem, size = 0x2000, scoped, tag = 'output window, operand 0, single buffered']
    #allocation3 [shape = 's32[1]{0}', space=sflag, size = 0x4, scoped, tag = 'scoped memory for simple_mlp_forward.1']
    %10 = vsyncpa [#allocation3], 0
    // Predicated region
    $region2: #{simple_mlp_forward.1} parent=1 // pred_check
      _
    $region3: #{simple_mlp_forward.1} parent=1 // pred_check_branch
      %12 = sbr.rel (0) target = $region5
    $region4: #{simple_mlp_forward.1} parent=1 // pred_region
      _
    $region5: #{simple_mlp_forward.1} parent=1 // pred_fallthru
      _
    // Predicated region
    $region6: #{simple_mlp_forward.1} parent=1 // pred_check
      _
    $region7: #{simple_mlp_forward.1} parent=1 // pred_check_branch
      %14 = sbr.rel (0) target = $region9
    $region8: #{simple_mlp_forward.1} parent=1 // pred_region
      _
    $region9: #{simple_mlp_forward.1} parent=1 // pred_fallthru
      _
    // Predicated region
    $region10: #{simple_mlp_forward.1} parent=1 // pred_check
      _
    $region11: #{simple_mlp_forward.1} parent=1 // pred_check_branch
      %16 = sbr.rel (0) target = $region13
    $region12: #{simple_mlp_forward.1} parent=1 // pred_region
      _
    $region13: #{simple_mlp_forward.1} parent=1 // pred_fallthru
      _
    // Predicated region
    $region14: #{simple_mlp_forward.1} parent=1 // pred_check
      _
    $region15: #{simple_mlp_forward.1} parent=1 // pred_check_branch
      %18 = sbr.rel (0) target = $region17
    $region16: #{simple_mlp_forward.1} parent=1 // pred_region
      _
    $region17: #{simple_mlp_forward.1} parent=1 // pred_fallthru
      _
    // Predicated region
    $region18: #{simple_mlp_forward.1} parent=1 // pred_check
      _
    $region19: #{simple_mlp_forward.1} parent=1 // pred_check_branch
      %20 = sbr.rel (0) target = $region21
    $region20: #{simple_mlp_forward.1} parent=1 // pred_region
      _
    $region21: #{simple_mlp_forward.1} parent=1 // pred_fallthru
      _
    %v22 = vld [vmem:[%s0] sm:$0xf]
    %v23 = vld [vmem:[%s0 + $0x4] sm:$0xf]
    %v24 = vld [vmem:[%s1] sm:$0xf]
    %v25 = vld [vmem:[%s1 + $0x4] sm:$0xf]
    %v26 = vld [vmem:[%s2] sm:$0x1]
    %v28 = vperm.slane %v26, 0
    %v32 = vunpack.c.l.b16 %v22
    %v33 = vunpack.c.l.b16 %v23
    %v34 = vpack.c.b16 %v33, %v32
    %v37 = vunpack.c.l.b16 %v24
    %v38 = vunpack.c.l.b16 %v25
    %v39 = vpack.c.b16 %v38, %v37
    %vm41 = vcmask 130048
    %v43 = vsel %vm41, %v34, 0
    %45 = vmatpush.bf16.msra.mxu0 0
    %46 = vmatpush.bf16.msra.mxu0 0
    %47 = vmatpush.bf16.msra.mxu0 0
    %48 = vmatpush.bf16.msra.mxu0 0
    %49 = vmatpush.bf16.msra.mxu0 0
    %50 = vmatpush.bf16.msra.mxu0 0
    %51 = vmatpush.bf16.msra.mxu0 0
    %52 = vmatpush.bf16.msra.mxu0 %v39
    %53 = vmatmul.bf16.gmra.mxu0 %v43
    %v54 = vpop.f32.mrf.mxu0
    %v55 = vadd.f32 %v28, %v54
    %v56 = vpop.f32.mrf.mxu0
    %v57 = vadd.f32 %v28, %v56
    %58 = vdwg.mxu0
    %v59 = vtanh.pop %v55
    %v60 = vtanh.pop %v57
    %v61 = vpack.c.bf16 %v60, %v59
    %v62 = vld [vmem:[%s3] sm:$0xf]
    %v63 = vld [vmem:[%s3 + $0x4] sm:$0xf]
    %v64 = vld [vmem:[%s3 + $0x8] sm:$0xf]
    %v65 = vld [vmem:[%s3 + $0xc] sm:$0xf]
    %v66 = vld [vmem:[%s4] sm:$0x1]
    %v68 = vperm.slane %v66, 0
    %v74 = vunpack.c.l.b16 %v62
    %v75 = vunpack.c.l.b16 %v63
    %v76 = vunpack.c.l.b16 %v64
    %v77 = vunpack.c.l.b16 %v65
    %v78 = vpack.c.b16 %v75, %v74
    %v79 = vpack.c.b16 %v77, %v76
    %vm82 = vcmask 261120
    %v84 = vsel %vm82, %v61, 0
    %86 = vmatpush.bf16.msra.mxu0 0
    %87 = vmatpush.bf16.msra.mxu0 0
    %88 = vmatpush.bf16.msra.mxu0 0
    %89 = vmatpush.bf16.msra.mxu0 0
    %90 = vmatpush.bf16.msra.mxu0 0
    %91 = vmatpush.bf16.msra.mxu0 0
    %92 = vmatpush.bf16.msra.mxu0 %v79
    %93 = vmatpush.bf16.msra.mxu0 %v78
    %94 = vmatmul.bf16.gmra.mxu0 %v84
    %v95 = vpop.f32.mrf.mxu0
    %v96 = vadd.f32 %v68, %v95
    %v97 = vpop.f32.mrf.mxu0
    %v98 = vadd.f32 %v68, %v97
    %99 = vdwg.mxu0
    %100 = vmax.xlane.f32.xlu0 %v96
    %v101 = vpop.xlane.xlu0 %100
    %102 = vmax.xlane.f32.xlu0 %v98
    %v103 = vpop.xlane.xlu0 %102
    %v104 = vsub.f32 %v96, %v101
    %v105 = vsub.f32 %v98, %v103
    %v106 = vmul.f32 %v104, 1.442695
    %v107 = vpow.pop %v106
    %v108 = vmul.f32 %v105, 1.442695
    %v109 = vpow.pop %v108
    %110 = vadd.xlane.f32.xlu0 %v107
    %v111 = vpop.xlane.xlu0 %110
    %112 = vadd.xlane.f32.xlu0 %v109
    %v113 = vpop.xlane.xlu0 %112
    %v114 = vlog2.pop %v111
    %v115 = vmul.f32 %v114, 0.6931472
    %v116 = vlog2.pop %v113
    %v117 = vmul.f32 %v116, 0.6931472
    %v118 = vsub.f32 %v104, %v115
    %v119 = vsub.f32 %v105, %v117
    %120 = vst [vmem:[#allocation2] sm:$0xff] %v118
    %121 = vst [vmem:[#allocation2 + $0x8] sm:$0xff] %v119
    // Predicated region
    $region22: #{simple_mlp_forward.1} parent=1 // pred_check
      _
    $region23: #{simple_mlp_forward.1} parent=1 // pred_check_branch
      %123 = sbr.rel (0) target = $region25
    $region24: #{simple_mlp_forward.1} parent=1 // pred_region
      %125 = vsyncadd [#allocation3], 0
      %s126 = sshll.u32 [#allocation2], 4
      %s127 = int_to_ptr.vmem [resolvable:$true] %s126
      %s128 = sshll.u32 %s5, 4
      %s129 = int_to_ptr.hbm [resolvable:$true] %s128
      %134 = dma.vmem_to_hbm [thread:$0]  %s127, 256, %s129, [#allocation3], 128, 128, 8
    $region25: #{simple_mlp_forward.1} parent=1 // pred_fallthru
      _
    // Predicated region
    $region26: #{simple_mlp_forward.1} parent=1 // pred_check
      _
    $region27: #{simple_mlp_forward.1} parent=1 // pred_check_branch
      %136 = sbr.rel (0) target = $region29
    $region28: #{simple_mlp_forward.1} parent=1 // pred_region
      %138 = dma.done [#allocation3], 256
    $region29: #{simple_mlp_forward.1} parent=1 // pred_fallthru
      _
    %139 = vsyncpa [#allocation3], 1

</llo_original>
